<compile_context>
chip_gen: v5e
topology: v5e:2x2
jax: 0.10.0
libtpu: 0.0.40
codegen_flags: <defaults>
</compile_context>

<pallas_src>
from functools import partial

import jax
import jax.numpy as jnp
from jax.experimental import pallas as pl
from jax.experimental.pallas import tpu as pltpu

_MIB = 1024 * 1024


def _round_up(x, m):
    return ((x + m - 1) // m) * m


def _vmem_capacity_bytes():
    """Per-core VMEM capacity; conservative 64 MiB fallback (v7x)."""
    try:
        info = pltpu.get_tpu_info()
        for name in ("vmem_capacity_bytes", "vmem_bytes", "vmem_size_bytes"):
            v = getattr(info, name, None)
            if v:
                return int(v)
    except Exception:
        pass
    return 64 * _MIB


def _vmem_limit(need_bytes):
    cap = _vmem_capacity_bytes()
    return int(min(cap - 4 * _MIB, max(32 * _MIB, need_bytes + 8 * _MIB)))


def _plan_propagate(n, f_pad, a_bytes, z_bytes, out_bytes):
    """Pick (n_pad, tm, tk, vmem_need) for the propagation kernel."""
    budget = int(_vmem_capacity_bytes() * 0.85)
    n128 = _round_up(n, 128)
    plan = None
    for tk_target in (2048, 1024, 512, 256, 128):
        n_pad = _round_up(n, tk_target)
        # Never blow the N x N adjacency up by more than ~12.5% extra padding
        # just to reach a bigger tile.
        if tk_target != 128 and n_pad > n128 + max(n128 // 8, 0):
            continue
        tk = min(tk_target, n_pad)
        tm = min(512, tk)                       # tm | tk | n_pad by construction
        need = (2 * n_pad * f_pad * z_bytes     # parity-indexed resident z
                + tm * f_pad * 4                # f32 accumulator
                + 2 * tm * tk * a_bytes         # A tiles, double-buffered
                + 2 * tm * f_pad * out_bytes)   # output blocks, double-buffered
        plan = (n_pad, tm, tk, need)
        if need <= budget:
            return plan
    return plan


def _plan_linear(in_feats, f_pad, tm, x_bytes, out_bytes):
    """Pick (in_pad, tk, vmem_need) for the linear kernel's contraction axis."""
    in128 = _round_up(in_feats, 128)
    tk = 128
    for cand in (512, 256):
        if _round_up(in_feats, cand) <= in128 + max(in128 // 8, 0):
            tk = cand
            break
    in_pad = _round_up(in_feats, tk)
    need = (2 * tm * tk * x_bytes               # x tiles
            + 2 * tk * f_pad * 4                # W^T tiles
            + 2 * f_pad * 4                     # bias (tiny, constant block)
            + tm * f_pad * 4                    # f32 accumulator
            + 2 * tm * f_pad * out_bytes)       # output blocks
    return in_pad, tk, need


# ---------------------------------------------------------------------------
# Kernel 1: Linear  z0 = x @ W.T + b   (W pre-transposed outside the kernel)
#   grid = (row_blocks, k_blocks over in_feats); W^T is streamed, not resident.
# ---------------------------------------------------------------------------
def _linear(x_p, wt_p, b_p, tm, tk, out_dtype, vmem_limit):
    n_pad, in_pad = x_p.shape
    f_pad = wt_p.shape[1]
    b2 = b_p.reshape(1, f_pad)

    def kernel(x_ref, wt_ref, b_ref, o_ref, acc_ref):
        k = pl.program_id(1)

        @pl.when(k == 0)
        def _():
            acc_ref[...] = jnp.zeros_like(acc_ref)

        acc_ref[...] += jnp.dot(
            x_ref[...], wt_ref[...], preferred_element_type=jnp.float32
        )

        @pl.when(k == pl.num_programs(1) - 1)
        def _():
            o_ref[...] = (acc_ref[...] + b_ref[...]).astype(o_ref.dtype)

    return pl.pallas_call(
        kernel,
        out_shape=jax.ShapeDtypeStruct((n_pad, f_pad), out_dtype),
        grid_spec=pltpu.PrefetchScalarGridSpec(
            num_scalar_prefetch=0,
            grid=(n_pad // tm, in_pad // tk),
            in_specs=[
                pl.BlockSpec((tm, tk), lambda i, k: (i, k)),     # x, streamed
                pl.BlockSpec((tk, f_pad), lambda i, k: (k, 0)),  # W^T, streamed
                pl.BlockSpec((1, f_pad), lambda i, k: (0, 0)),   # bias (tiny)
            ],
            out_specs=pl.BlockSpec((tm, f_pad), lambda i, k: (i, 0)),
            scratch_shapes=[pltpu.VMEM((tm, f_pad), jnp.float32)],
        ),
        compiler_params=pltpu.CompilerParams(
            dimension_semantics=("parallel", "arbitrary"),
            vmem_limit_bytes=vmem_limit,
        ),
    )(x_p, wt_p, b2)


# ---------------------------------------------------------------------------
# Kernel 2: fused propagation   for l in range(n_layers): z = a @ z
#   grid = (n_layers, row_blocks, k_blocks); z stays resident in a single
#   parity-indexed VMEM scratch; only A tiles are streamed from HBM (bf16).
# ---------------------------------------------------------------------------
def _propagate(a_p, z0_p, n_layers, tm, tk, out_dtype, vmem_limit):
    n_pad, f_pad = z0_p.shape
    ni, nk = n_pad // tm, n_pad // tk
    n_last = n_layers - 1

    def kernel(z0_hbm, a_ref, o_ref, zbuf, acc, sem):
        l = pl.program_id(0)
        i = pl.program_id(1)
        k = pl.program_id(2)

        # Seed zbuf[0] with the linear output exactly once; z0 never enters the
        # BlockSpec pipeline (no double-buffered resident copy).
        @pl.when((l == 0) & (i == 0) & (k == 0))
        def _():
            cp = pltpu.make_async_copy(z0_hbm, zbuf.at[0], sem)
            cp.start()
            cp.wait()

        @pl.when(k == 0)
        def _():
            acc[...] = jnp.zeros_like(acc)

        parity = l % 2
        koff = pl.multiple_of(k * tk, tk)
        z_tile = zbuf[parity, pl.ds(koff, tk), :]        # single-buffer read
        acc[...] += jnp.dot(a_ref[...], z_tile, preferred_element_type=jnp.float32)

        @pl.when(k == nk - 1)
        def _():
            res = acc[...]
            ioff = pl.multiple_of(i * tm, tm)
            zbuf[1 - parity, pl.ds(ioff, tm), :] = res.astype(zbuf.dtype)

            @pl.when(l == n_last)
            def _():
                o_ref[...] = res.astype(o_ref.dtype)

    return pl.pallas_call(
        kernel,
        out_shape=jax.ShapeDtypeStruct((n_pad, f_pad), out_dtype),
        grid_spec=pltpu.PrefetchScalarGridSpec(
            num_scalar_prefetch=0,
            grid=(n_layers, ni, nk),
            in_specs=[
                pl.BlockSpec(memory_space=pl.ANY),               # z0: stays in HBM
                pl.BlockSpec((tm, tk), lambda l, i, k: (i, k)),  # A: streamed
            ],
            # Output blocks only advance (hence only flush) on the final layer;
            # earlier layers keep index (0, 0), which is never written back
            # because the block index does not change.
            out_specs=pl.BlockSpec(
                (tm, f_pad), lambda l, i, k: (jnp.where(l == n_last, i, 0), 0)
            ),
            scratch_shapes=[
                pltpu.VMEM((2, n_pad, f_pad), z0_p.dtype),  # parity-indexed z
                pltpu.VMEM((tm, f_pad), jnp.float32),       # f32 accumulator
                pltpu.SemaphoreType.DMA(()),                # z0 seed DMA sem
            ],
        ),
        compiler_params=pltpu.CompilerParams(
            # layer/row/k all carry sequential deps through the VMEM z scratch.
            dimension_semantics=("arbitrary", "arbitrary", "arbitrary"),
            vmem_limit_bytes=vmem_limit,
        ),
    )(z0_p, a_p)


# ---------------------------------------------------------------------------
# Network wrapper (mirrors PyTorch Network.forward)
# ---------------------------------------------------------------------------
def network_forward(a, x, w, b, n_layers, *, prop_dtype=jnp.bfloat16):
    n, in_feats = x.shape
    out_feats = w.shape[0]
    out_dtype = x.dtype
    f_pad = _round_up(out_feats, 128)          # lane-dense feature dim

    p_bytes = jnp.dtype(prop_dtype).itemsize
    o_bytes = jnp.dtype(out_dtype).itemsize

    if n_layers > 0:
        n_pad, tm, tk, prop_need = _plan_propagate(n, f_pad, p_bytes, p_bytes, o_bytes)
    else:
        n_pad = _round_up(n, 128)
        tm = next(t for t in (512, 256, 128) if n_pad % t == 0)
        tk, prop_need = 0, 0

    lin_out_dtype = prop_dtype if n_layers > 0 else out_dtype
    in_pad, tk_in, lin_need = _plan_linear(
        in_feats, f_pad, tm, jnp.dtype(x.dtype).itemsize,
        jnp.dtype(lin_out_dtype).itemsize)

    # --- pad once in the wrapper (skipped when already aligned) --------------
    if (n, in_feats) != (n_pad, in_pad):
        x_p = jnp.zeros((n_pad, in_pad), x.dtype).at[:n, :in_feats].set(x)
    else:
        x_p = x
    if (out_feats, in_feats) != (f_pad, in_pad):
        w_p = jnp.zeros((f_pad, in_pad), w.dtype).at[:out_feats, :in_feats].set(w)
    else:
        w_p = w
    b_p = b if out_feats == f_pad else jnp.zeros((f_pad,), b.dtype).at[:out_feats].set(b)
    wt_p = w_p.T  # pre-transpose once (plain JAX): no in-kernel XLU transpose

    z = _linear(x_p, wt_p, b_p, tm, tk_in, lin_out_dtype, _vmem_limit(lin_need))

    if n_layers > 0:
        # Cast A to the streaming dtype; fold the cast into the single padding
        # pass when padding is required, skip the copy entirely when neither is.
        if n != n_pad:
            a_p = jnp.zeros((n_pad, n_pad), prop_dtype).at[:n, :n].set(
                a.astype(prop_dtype))
        elif a.dtype != jnp.dtype(prop_dtype):
            a_p = a.astype(prop_dtype)
        else:
            a_p = a
        z = _propagate(a_p, z, n_layers, tm, tk, out_dtype, _vmem_limit(prop_need))

    return z[:n, :out_feats]


network_forward_jit = jax.jit(
    network_forward, static_argnums=(4,), static_argnames=("prop_dtype",)
)


if __name__ == "__main__":
    key = jax.random.PRNGKey(0)
    k_a, k_x, k_w, k_b = jax.random.split(key, 4)

    # Small shapes consistent with the module: N nodes, in_feats, out_feats.
    N, in_feats, out_feats, n_layers = 16, 32, 8, 2

    a = jax.random.normal(k_a, (N, N), dtype=jnp.float32) * 0.1
    x = jax.random.normal(k_x, (N, in_feats), dtype=jnp.float32)

    # nn.Linear-style deterministic init: U(-1/sqrt(in), 1/sqrt(in))
    bound = 1.0 / (in_feats ** 0.5)
    w = jax.random.uniform(
        k_w, (out_feats, in_feats), dtype=jnp.float32, minval=-bound, maxval=bound
    )
    b = jax.random.uniform(
        k_b, (out_feats,), dtype=jnp.float32, minval=-bound, maxval=bound
    )

    # Reference in plain JAX (f32).
    z_ref = x @ w.T + b
    for _ in range(n_layers):
        z_ref = a @ z_ref

    # f32 propagation path: must match the reference tightly.
    out_f32 = network_forward_jit(a, x, w, b, n_layers, prop_dtype=jnp.float32)
    out_f32 = jax.block_until_ready(out_f32)
    assert jnp.allclose(out_f32, z_ref, atol=1e-4, rtol=1e-4), (
        f"f32 mismatch: max|err|={jnp.max(jnp.abs(out_f32 - z_ref))}"
    )

    # Default (bf16-streamed A/z, f32 accumulator): bf16-appropriate tolerance.
    out = network_forward_jit(a, x, w, b, n_layers)
    out = jax.block_until_ready(out)
    assert jnp.allclose(out, z_ref, atol=3e-2, rtol=3e-2), (
        f"bf16 mismatch: max|err|={jnp.max(jnp.abs(out - z_ref))}"
    )

    print("KERNEL_OK")
</pallas_src>

<mosaic_0001>
module attributes {stable_mosaic.version = 11 : i64} {
  func.func @kernel(%arg0: i32, %arg1: i32, %arg2: memref<128x128xf32, #tpu.memory_space<vmem>>, %arg3: memref<128x128xf32, #tpu.memory_space<vmem>>, %arg4: memref<1x128xf32, #tpu.memory_space<vmem>>, %arg5: memref<128x128xf32, #tpu.memory_space<vmem>>, %arg6: memref<128x128xf32, #tpu.memory_space<vmem>>) attributes {dimension_semantics = [#tpu.dimension_semantics<parallel>, #tpu.dimension_semantics<arbitrary>], iteration_bounds = array<i64: 1, 1>, scalar_prefetch = 0 : i64, scratch_operands = 1 : i64, tpu.core_type = #tpu.core_type<tc>, window_params = [{transform_indices = @transform_0, window_bounds = array<i64: 128, 128>}, {transform_indices = @transform_1, window_bounds = array<i64: 128, 128>}, {pipeline_mode = #tpu.pipeline_mode<synchronous>, transform_indices = @transform_2, window_bounds = array<i64: 1, 128>}, {transform_indices = @transform_3, window_bounds = array<i64: 128, 128>}]} {
    %c0_i32 = arith.constant 0 : i32
    %0 = arith.cmpi eq, %arg1, %c0_i32 : i32
    %1 = arith.extui %0 : i1 to i32
    %c0_i32_0 = arith.constant 0 : i32
    %2 = arith.cmpi ne, %1, %c0_i32_0 : i32
    scf.if %2 {
      %cst_10 = arith.constant 0.000000e+00 : f32
      %12 = vector.broadcast %cst_10 : f32 to vector<128x128xf32>
      %c0_11 = arith.constant 0 : index
      %c0_12 = arith.constant 0 : index
      %13 = vector.load %arg6[%c0_11, %c0_12] : memref<128x128xf32, #tpu.memory_space<vmem>>, vector<128x128xf32>
      tpu.vector_store %arg6[%c0_11, %c0_12], %12 {strides = array<i32>} : memref<128x128xf32, #tpu.memory_space<vmem>>, vector<128x128xf32>,
    } else {
    }
    %c0 = arith.constant 0 : index
    %c0_1 = arith.constant 0 : index
    %3 = vector.load %arg6[%c0, %c0_1] : memref<128x128xf32, #tpu.memory_space<vmem>>, vector<128x128xf32>
    %c0_2 = arith.constant 0 : index
    %c0_3 = arith.constant 0 : index
    %4 = vector.load %arg2[%c0_2, %c0_3] : memref<128x128xf32, #tpu.memory_space<vmem>>, vector<128x128xf32>
    %c0_4 = arith.constant 0 : index
    %c0_5 = arith.constant 0 : index
    %5 = vector.load %arg3[%c0_4, %c0_5] : memref<128x128xf32, #tpu.memory_space<vmem>>, vector<128x128xf32>
    %cst = arith.constant dense<0.000000e+00> : vector<128x128xf32>
    %6 = tpu.matmul %4, %5, %cst {dimension_numbers = #tpu.dot_dimension_numbers<[1], [0], [0], [1], [0, 0, 1, 1], [], []>} : vector<128x128xf32>, vector<128x128xf32>, vector<128x128xf32> -> vector<128x128xf32>
    %7 = arith.addf %3, %6 : vector<128x128xf32>
    %c0_6 = arith.constant 0 : index
    %c0_7 = arith.constant 0 : index
    %8 = vector.load %arg6[%c0_6, %c0_7] : memref<128x128xf32, #tpu.memory_space<vmem>>, vector<128x128xf32>
    tpu.vector_store %arg6[%c0_6, %c0_7], %7 {strides = array<i32>} : memref<128x128xf32, #tpu.memory_space<vmem>>, vector<128x128xf32>,
    %c0_i32_8 = arith.constant 0 : i32
    %9 = arith.cmpi eq, %arg1, %c0_i32_8 : i32
    %10 = arith.extui %9 : i1 to i32
    %c0_i32_9 = arith.constant 0 : i32
    %11 = arith.cmpi ne, %10, %c0_i32_9 : i32
    scf.if %11 {
      %c0_10 = arith.constant 0 : index
      %c0_11 = arith.constant 0 : index
      %12 = vector.load %arg6[%c0_10, %c0_11] : memref<128x128xf32, #tpu.memory_space<vmem>>, vector<128x128xf32>
      %c0_12 = arith.constant 0 : index
      %c0_13 = arith.constant 0 : index
      %13 = vector.load %arg4[%c0_12, %c0_13] : memref<1x128xf32, #tpu.memory_space<vmem>>, vector<1x128xf32>
      %14 = vector.broadcast %13 : vector<1x128xf32> to vector<128x128xf32>
      %15 = arith.addf %12, %14 : vector<128x128xf32>
      %c0_14 = arith.constant 0 : index
      %c0_15 = arith.constant 0 : index
      %16 = vector.load %arg5[%c0_14, %c0_15] : memref<128x128xf32, #tpu.memory_space<vmem>>, vector<128x128xf32>
      tpu.vector_store %arg5[%c0_14, %c0_15], %15 {strides = array<i32>} : memref<128x128xf32, #tpu.memory_space<vmem>>, vector<128x128xf32>,
    } else {
    }
    return
  }
  func.func @transform_0(%arg0: i32, %arg1: i32) -> (i32, i32) {
    %c0_i32 = arith.constant 0 : i32
    return %arg0, %arg1 : i32, i32
  }
  func.func @transform_1(%arg0: i32, %arg1: i32) -> (i32, i32) {
    %c0_i32 = arith.constant 0 : i32
    %c0_i32_0 = arith.constant 0 : i32
    return %arg1, %c0_i32 : i32, i32
  }
  func.func @transform_2(%arg0: i32, %arg1: i32) -> (i32, i32) {
    %c0_i32 = arith.constant 0 : i32
    %c0_i32_0 = arith.constant 0 : i32
    %c0_i32_1 = arith.constant 0 : i32
    return %c0_i32, %c0_i32_0 : i32, i32
  }
  func.func @transform_3(%arg0: i32, %arg1: i32) -> (i32, i32) {
    %c0_i32 = arith.constant 0 : i32
    %c0_i32_0 = arith.constant 0 : i32
    return %arg0, %c0_i32 : i32, i32
  }
}

module attributes {stable_mosaic.version = 11 : i64} {
  func.func @kernel(%arg0: i32, %arg1: i32, %arg2: i32, %arg3: memref<128x128xf32, #tpu.memory_space<any>>, %arg4: memref<128x128xf32, #tpu.memory_space<vmem>>, %arg5: memref<128x128xf32, #tpu.memory_space<vmem>>, %arg6: memref<2x128x128xf32, #tpu.memory_space<vmem>>, %arg7: memref<128x128xf32, #tpu.memory_space<vmem>>, %arg8: memref<!tpu.dma_semaphore, #tpu.memory_space<semaphore_mem>>) attributes {dimension_semantics = [#tpu.dimension_semantics<arbitrary>, #tpu.dimension_semantics<arbitrary>, #tpu.dimension_semantics<arbitrary>], iteration_bounds = array<i64: 2, 1, 1>, scalar_prefetch = 0 : i64, scratch_operands = 3 : i64, tpu.core_type = #tpu.core_type<tc>, window_params = [{}, {transform_indices = @transform_1, window_bounds = array<i64: 128, 128>}, {transform_indices = @transform_2, window_bounds = array<i64: 128, 128>}]} {
    %c0_i32 = arith.constant 0 : i32
    %0 = arith.cmpi eq, %arg0, %c0_i32 : i32
    %c0_i32_0 = arith.constant 0 : i32
    %1 = arith.cmpi eq, %arg1, %c0_i32_0 : i32
    %2 = arith.andi %0, %1 : i1
    %c0_i32_1 = arith.constant 0 : i32
    %3 = arith.cmpi eq, %arg2, %c0_i32_1 : i32
    %4 = arith.andi %2, %3 : i1
    %5 = arith.extui %4 : i1 to i32
    %c0_i32_2 = arith.constant 0 : i32
    %6 = arith.cmpi ne, %5, %c0_i32_2 : i32
    scf.if %6 {
      %c0_i32_17 = arith.constant 0 : i32
      %c0_i32_18 = arith.constant 0 : i32
      %c0_i32_19 = arith.constant 0 : i32
      %34 = tpu.memref_slice %arg6[%c0_i32_17, %c0_i32_18, %c0_i32_19] : memref<2x128x128xf32, #tpu.memory_space<vmem>> -> memref<1x128x128xf32, #tpu.memory_space<vmem>>
      %35 = tpu.memref_squeeze %34 : memref<1x128x128xf32, #tpu.memory_space<vmem>> -> memref<128x128xf32, #tpu.memory_space<vmem>>
      tpu.enqueue_dma source(%arg3 : memref<128x128xf32, #tpu.memory_space<any>>) target(%35 : memref<128x128xf32, #tpu.memory_space<vmem>>) target_semaphore(%arg8 : memref<!tpu.dma_semaphore, #tpu.memory_space<semaphore_mem>>)
      %c0_i32_20 = arith.constant 0 : i32
      %c0_i32_21 = arith.constant 0 : i32
      %c0_i32_22 = arith.constant 0 : i32
      %36 = tpu.memref_slice %arg6[%c0_i32_20, %c0_i32_21, %c0_i32_22] : memref<2x128x128xf32, #tpu.memory_space<vmem>> -> memref<1x128x128xf32, #tpu.memory_space<vmem>>
      %37 = tpu.memref_squeeze %36 : memref<1x128x128xf32, #tpu.memory_space<vmem>> -> memref<128x128xf32, #tpu.memory_space<vmem>>
      tpu.wait_dma2 semaphore(%arg8 : memref<!tpu.dma_semaphore, #tpu.memory_space<semaphore_mem>>) src(%arg3 : memref<128x128xf32, #tpu.memory_space<any>>) dst(%37 : memref<128x128xf32, #tpu.memory_space<vmem>>)
    } else {
    }
    %c0_i32_3 = arith.constant 0 : i32
    %7 = arith.cmpi eq, %arg2, %c0_i32_3 : i32
    %8 = arith.extui %7 : i1 to i32
    %c0_i32_4 = arith.constant 0 : i32
    %9 = arith.cmpi ne, %8, %c0_i32_4 : i32
    scf.if %9 {
      %cst_17 = arith.constant 0.000000e+00 : f32
      %34 = vector.broadcast %cst_17 : f32 to vector<128x128xf32>
      %c0_18 = arith.constant 0 : index
      %c0_19 = arith.constant 0 : index
      %35 = vector.load %arg7[%c0_18, %c0_19] : memref<128x128xf32, #tpu.memory_space<vmem>>, vector<128x128xf32>
      tpu.vector_store %arg7[%c0_18, %c0_19], %34 {strides = array<i32>} : memref<128x128xf32, #tpu.memory_space<vmem>>, vector<128x128xf32>,
    } else {
    }
    %c2_i32 = arith.constant 2 : i32
    %c0_i32_5 = arith.constant 0 : i32
    %10 = arith.cmpi eq, %c2_i32, %c0_i32_5 : i32
    %c1_i32 = arith.constant 1 : i32
    %11 = arith.select %10, %c1_i32, %c2_i32 : i32
    %12 = arith.remsi %arg0, %11 : i32
    %c0_i32_6 = arith.constant 0 : i32
    %13 = arith.cmpi ne, %12, %c0_i32_6 : i32
    %c0_i32_7 = arith.constant 0 : i32
    %14 = arith.cmpi slt, %12, %c0_i32_7 : i32
    %c0_i32_8 = arith.constant 0 : i32
    %15 = arith.cmpi slt, %11, %c0_i32_8 : i32
    %16 = arith.xori %14, %15 : i1
    %17 = arith.andi %16, %13 : i1
    %18 = arith.addi %12, %11 : i32
    %19 = arith.select %17, %18, %12 : i32
    %c128_i32 = arith.constant 128 : i32
    %20 = arith.muli %arg2, %c128_i32 : i32
    %21 = tpu.assume_multiple %20, 128 : i32
    %22 = arith.index_cast %19 : i32 to index
    %23 = arith.index_cast %21 : i32 to index
    %c0 = arith.constant 0 : index
    %24 = vector.load %arg6[%22, %23, %c0] : memref<2x128x128xf32, #tpu.memory_space<vmem>>, vector<1x128x128xf32>
    %25 = vector.shape_cast %24 : vector<1x128x128xf32> to vector<128x128xf32>
    %c0_9 = arith.constant 0 : index
    %c0_10 = arith.constant 0 : index
    %26 = vector.load %arg7[%c0_9, %c0_10] : memref<128x128xf32, #tpu.memory_space<vmem>>, vector<128x128xf32>
    %c0_11 = arith.constant 0 : index
    %c0_12 = arith.constant 0 : index
    %27 = vector.load %arg4[%c0_11, %c0_12] : memref<128x128xf32, #tpu.memory_space<vmem>>, vector<128x128xf32>
    %cst = arith.constant dense<0.000000e+00> : vector<128x128xf32>
    %28 = tpu.matmul %27, %25, %cst {dimension_numbers = #tpu.dot_dimension_numbers<[1], [0], [0], [1], [0, 0, 1, 1], [], []>} : vector<128x128xf32>, vector<128x128xf32>, vector<128x128xf32> -> vector<128x128xf32>
    %29 = arith.addf %26, %28 : vector<128x128xf32>
    %c0_13 = arith.constant 0 : index
    %c0_14 = arith.constant 0 : index
    %30 = vector.load %arg7[%c0_13, %c0_14] : memref<128x128xf32, #tpu.memory_space<vmem>>, vector<128x128xf32>
    tpu.vector_store %arg7[%c0_13, %c0_14], %29 {strides = array<i32>} : memref<128x128xf32, #tpu.memory_space<vmem>>, vector<128x128xf32>,
    %c0_i32_15 = arith.constant 0 : i32
    %31 = arith.cmpi eq, %arg2, %c0_i32_15 : i32
    %32 = arith.extui %31 : i1 to i32
    %c0_i32_16 = arith.constant 0 : i32
    %33 = arith.cmpi ne, %32, %c0_i32_16 : i32
    scf.if %33 {
      %c0_17 = arith.constant 0 : index
      %c0_18 = arith.constant 0 : index
      %34 = vector.load %arg7[%c0_17, %c0_18] : memref<128x128xf32, #tpu.memory_space<vmem>>, vector<128x128xf32>
      %c128_i32_19 = arith.constant 128 : i32
      %35 = arith.muli %arg1, %c128_i32_19 : i32
      %36 = tpu.assume_multiple %35, 128 : i32
      %c1_i32_20 = arith.constant 1 : i32
      %37 = arith.subi %c1_i32_20, %19 : i32
      %38 = arith.index_cast %37 : i32 to index
      %39 = arith.index_cast %36 : i32 to index
      %c0_21 = arith.constant 0 : index
      %40 = vector.load %arg6[%38, %39, %c0_21] : memref<2x128x128xf32, #tpu.memory_space<vmem>>, vector<1x128x128xf32>
      %41 = vector.shape_cast %40 : vector<1x128x128xf32> to vector<128x128xf32>
      %42 = vector.shape_cast %34 : vector<128x128xf32> to vector<1x128x128xf32>
      tpu.vector_store %arg6[%38, %39, %c0_21], %42 {strides = array<i32>} : memref<2x128x128xf32, #tpu.memory_space<vmem>>, vector<1x128x128xf32>,
      %c1_i32_22 = arith.constant 1 : i32
      %43 = arith.cmpi eq, %arg0, %c1_i32_22 : i32
      %44 = arith.extui %43 : i1 to i32
      %c0_i32_23 = arith.constant 0 : i32
      %45 = arith.cmpi ne, %44, %c0_i32_23 : i32
      scf.if %45 {
        %c0_24 = arith.constant 0 : index
        %c0_25 = arith.constant 0 : index
        %46 = vector.load %arg5[%c0_24, %c0_25] : memref<128x128xf32, #tpu.memory_space<vmem>>, vector<128x128xf32>
        tpu.vector_store %arg5[%c0_24, %c0_25], %34 {strides = array<i32>} : memref<128x128xf32, #tpu.memory_space<vmem>>, vector<128x128xf32>,
      } else {
      }
    } else {
    }
    return
  }
  func.func @transform_1(%arg0: i32, %arg1: i32, %arg2: i32) -> (i32, i32) {
    %c0_i32 = arith.constant 0 : i32
    return %arg1, %arg2 : i32, i32
  }
  func.func @transform_2(%arg0: i32, %arg1: i32, %arg2: i32) -> (i32, i32) {
    %c1_i32 = arith.constant 1 : i32
    %0 = arith.cmpi eq, %arg0, %c1_i32 : i32
    %c0_i32 = arith.constant 0 : i32
    %1 = arith.select %0, %arg1, %c0_i32 : i32
    %c0_i32_0 = arith.constant 0 : i32
    %c0_i32_1 = arith.constant 0 : i32
    return %1, %c0_i32_0 : i32, i32
  }
}

</mosaic_0001>

<llo_original>
// kernel: network_forward.3
$region0: #{network_forward.3}
  #allocation0 [shape = 'u32[]', space=smem, size = 0x4, offset = 0x4, fixed_abs, tag = 'smem constant byte address 0x4 - core index']
  #allocation1 [shape = 'u32[72,128]{1,0:T(1,128)}', space=vmem, size = 0x9000, scoped, tag = 'internal scratch']
  #allocation2 [shape = 'f32[2,128,128]{2,1,0:T(8,128)}', space=vmem, size = 0x20000, scoped, tag = 'scratch operand']
  #allocation3 [shape = 'f32[128,128]{1,0:T(8,128)}', space=vmem, size = 0x10000, scoped, tag = 'scratch operand']
  #allocation4 [shape = 's32[1]{0}', space=sflag, size = 0x4, scoped, tag = 'scratch operand']
  #allocation5 [shape = 's32[]', space=sflag, size = 0x4, offset = 0, fixed_abs, tag = 'sflag constant byte address 0x0 - dummy sync flag']
  %s0 = inlined_call_operand.vmem [shape: f32[128,128], index: 0, kind: input, shape index: {}]
  %s1 = inlined_call_operand.vmem [shape: f32[128,128], index: 1, kind: input, shape index: {}]
  %s2 = inlined_call_operand.vmem [shape: f32[128,128], index: 2, kind: output, shape index: {}]
  %s3 = sld [smem:[#allocation0]]
  $region72: #{network_forward.3} parent=0
    _
  %s5 = ssub.s32 1, %s3
  %s6 = scalar_select 0, %s5, %s3
  loop: start=0, step=1, limit=4
  $region2: #{network_forward.3} parent=0 // loop_pre_header
    _
  $region3: #{network_forward.3} parent=0 // loop_header
    %s8 = sphi 0, %s12
    %p9 = scmp.ge.s32.totalorder %s8, 4
    %s15 = sphi 0, %s34
    %s16 = sphi 0, %s30
    %s17 = sphi 0, %s26
    %s18 = sphi 0, %s15
    %s19 = sphi 0, %s16
    %s20 = sphi 0, %s17
    %s21 = sphi 0, %s18
    %s22 = sphi 0, %s19
    %s23 = sphi 0, %s20
    %s39 = sphi 0, %s41
    %s42 = sphi 0, %s39
    %s43 = sphi 0, %s42
    %s59 = sphi 0, %s43
    %s69 = sphi 0, %s71
    %s72 = sphi 0, %s69
    %s73 = sphi 0, %s72
    %s89 = sphi 0, %s73
  $region4: #{network_forward.3} parent=0 // loop_header_branch
    %11 = sbr.rel (%p9) target = $region8
  $region5: #{network_forward.3} parent=0 // loop_body
    %s13 = ssub.s32 %s8, 1
    %s14 = ssub.s32 %s8, 2
    %s24 = sadd.s32 1, %s17
    %p25 = scmp.ge.s32.totalorder %s24, 1
    %s26 = scalar_select %p25, 0, %s24
    %s27 = sadd.s32 1, %s16
    %s28 = scalar_select %p25, %s27, %s16
    %p29 = scmp.ge.s32.totalorder %s28, 1
    %s30 = scalar_select %p29, 0, %s28
    %s31 = sadd.s32 1, %s15
    %s32 = scalar_select %p29, %s31, %s15
    %p33 = scmp.ge.s32.totalorder %s32, 2
    %s34 = scalar_select %p33, 0, %s32
    %s35 = ssub.s32 %s16, %s30
    %s36 = ssub.s32 %s17, %s26
    %s37 = sor.u32 %s35, %s36
    %p38 = scmp.eq.s32.totalorder %s37, 0
    %s40 = sadd.s32 %s39, 1
    %s41 = scalar_select %p38, %s39, %s40
    %p44 = pneg %p38
    %p45 = scmp.eq.s32.totalorder %s8, 1
    %p46 = por %p44, %p45
    %p47 = scmp.ne.s32.totalorder %s39, %s42
    %p48 = scmp.eq.s32.totalorder %s8, 0
    %p49 = por %p47, %p48
    %p50 = scmp.ne.s32.totalorder %s39, %s42
    %p51 = scmp.eq.s32.totalorder %s13, 1
    %p52 = por %p50, %p51
    %p53 = scmp.ne.s32.totalorder %s42, %s43
    %p54 = scmp.eq.s32.totalorder %s13, 0
    %p55 = por %p53, %p54
    %p56 = scmp.ne.s32.totalorder %s42, %s43
    %p57 = scmp.eq.s32.totalorder %s14, 1
    %p58 = por %p56, %p57
    %p60 = scmp.ne.s32.totalorder %s43, %s59
    %p61 = scmp.eq.s32.totalorder %s14, 0
    %p62 = por %p60, %p61
    %p63 = scmp.eq.s32.totalorder %s15, 1
    %s64 = scalar_select %p63, %s16, 0
    %p65 = scmp.eq.s32.totalorder %s34, 1
    %s66 = scalar_select %p65, %s30, 0
    %s67 = ssub.s32 %s64, %s66
    %p68 = scmp.eq.s32.totalorder %s67, 0
    %s70 = sadd.s32 %s69, 1
    %s71 = scalar_select %p68, %s69, %s70
    %p74 = pneg %p68
    %p75 = scmp.eq.s32.totalorder %s8, 1
    %p76 = por %p74, %p75
    %p77 = scmp.ne.s32.totalorder %s69, %s72
    %p78 = scmp.eq.s32.totalorder %s8, 0
    %p79 = por %p77, %p78
    %p80 = scmp.ne.s32.totalorder %s69, %s72
    %p81 = scmp.eq.s32.totalorder %s13, 1
    %p82 = por %p80, %p81
    %p83 = scmp.ne.s32.totalorder %s72, %s73
    %p84 = scmp.eq.s32.totalorder %s13, 0
    %p85 = por %p83, %p84
    %p86 = scmp.ne.s32.totalorder %s72, %s73
    %p87 = scmp.eq.s32.totalorder %s14, 1
    %p88 = por %p86, %p87
    %p90 = scmp.ne.s32.totalorder %s73, %s89
    %p91 = scmp.eq.s32.totalorder %s14, 0
    %p92 = por %p90, %p91
    %p93 = scmp.le.s32.totalorder 1, %s8
    %p94 = scmp.lt.s32.totalorder %s8, 3
    %p95 = pnand %p93, %p94
    %p96 = pneg %p95
    // Predicated region
    $region9: #{network_forward.3} parent=5 // pred_check
      _
    $region10: #{network_forward.3} parent=5 // pred_check_branch
      %98 = sbr.rel (%p95) target = $region12
    $region11: #{network_forward.3} parent=5 // pred_region
      %s99 = ssub.s32 %s8, 1
      // Predicated region
      $region13: #{network_forward.3} parent=11 // pred_check
        %p100 = pneg %p55
      $region14: #{network_forward.3} parent=11 // pred_check_branch
        %102 = sbr.rel (%p100) target = $region16
      $region15: #{network_forward.3} parent=11 // pred_region
        %s103 = smul.u32 16, %s19
        %p104 = scmp.lt.s32.totalorder %s103, 15
        %s105 = scalar_select %p104, %s103, 15
        %p106 = scmp.lt.s32.totalorder %s20, 0
        %s107 = scalar_select %p106, %s20, 0
        %s108 = sadd.s32 %s107, %s105
        %s109 = smul.addr %s108, 8
        %s110 = scalar_lea.vmem %s1, %s109
        %s111 = smul.u32 16, %s19
      $region16: #{network_forward.3} parent=11 // pred_fallthru
        _
    $region12: #{network_forward.3} parent=5 // pred_fallthru
      _
    %p112 = scmp.lt.s32.totalorder %s8, 2
    // Predicated region
    $region17: #{network_forward.3} parent=5 // pred_check
      %p113 = pneg %p112
    $region18: #{network_forward.3} parent=5 // pred_check_branch
      %115 = sbr.rel (%p113) target = $region20
    $region19: #{network_forward.3} parent=5 // pred_region
      _
    $region20: #{network_forward.3} parent=5 // pred_fallthru
      _
    %p116 = scmp.le.s32.totalorder 1, %s8
    %p117 = scmp.lt.s32.totalorder %s8, 3
    %p118 = pnand %p116, %p117
    %p119 = pneg %p118
    // Predicated region
    $region21: #{network_forward.3} parent=5 // pred_check
      _
    $region22: #{network_forward.3} parent=5 // pred_check_branch
      %121 = sbr.rel (%p118) target = $region24
    $region23: #{network_forward.3} parent=5 // pred_region
      %s122 = ssub.s32 %s8, 1
      %s123 = smul.u32 16, %s19
      %p124 = scmp.lt.s32.totalorder %s123, 15
      %s125 = scalar_select %p124, %s123, 15
      %p126 = scmp.lt.s32.totalorder %s20, 0
      %s127 = scalar_select %p126, %s20, 0
      %s128 = sadd.s32 %s127, %s125
      %s129 = smul.addr %s128, 8
      %s130 = scalar_lea.vmem %s1, %s129
      %p131 = pneg %p55
      %p132 = pneg %p52
      %p133 = pneg %p85
      %p134 = pneg %p82
      %p135 = scmp.eq.s32.totalorder %s18, 1
      %s136 = scalar_select %p135, %s19, 0
      %s137 = smul.u32 16, %s136
      %p138 = scmp.lt.s32.totalorder %s137, 15
      %s139 = scalar_select %p138, %s137, 15
      %s140 = smul.addr %s139, 8
      %s141 = scalar_lea.vmem %s2, %s140
      %s142 = smul.u32 16, %s19
      %p143 = scmp.lt.s32.totalorder %s142, 15
      %s144 = scalar_select %p143, %s142, 15
      %p145 = scmp.lt.s32.totalorder %s20, 0
      %s146 = scalar_select %p145, %s20, 0
      %s147 = sadd.s32 %s146, %s144
      %s148 = smul.addr %s147, 8
      %s149 = scalar_lea.vmem %s1, %s148
      %s150 = smul.u32 16, %s19
      %p151 = scmp.eq.s32.totalorder %s18, 1
      %s152 = scalar_select %p151, %s19, 0
      %s153 = smul.u32 16, %s152
      %p154 = scmp.lt.s32.totalorder %s153, 15
      %s155 = scalar_select %p154, %s153, 15
      %s156 = smul.addr %s155, 8
      %s157 = scalar_lea.vmem %s2, %s156
      %p158 = scmp.eq.s32.totalorder %s18, 1
      %s159 = scalar_select %p158, %s19, 0
      %s160 = smul.u32 16, %s159
      %p161 = scmp.eq.s32.totalorder %s18, 0
      %p162 = scmp.eq.s32.totalorder %s19, 0
      %p163 = pnand %p161, %p162
      %p164 = pneg %p163
      %p165 = scmp.eq.s32.totalorder %s20, 0
      %p166 = pnand %p164, %p165
      %p167 = pneg %p166
      // Predicated region
      $region25: #{network_forward.3} parent=23 // pred_check
        _
      $region26: #{network_forward.3} parent=23 // pred_check_branch
        %169 = sbr.rel (%p166) target = $region28
      $region27: #{network_forward.3} parent=23 // pred_region
        // Predicated region
        $region29: #{network_forward.3} parent=27 // pred_check
          _
        $region30: #{network_forward.3} parent=27 // pred_check_branch
          %171 = sbr.rel (0) target = $region32
        $region31: #{network_forward.3} parent=27 // pred_region
          loop: start=0, step=1, limit=1
          $region33: #{network_forward.3} parent=31 // loop_pre_header
            _
          $region34: #{network_forward.3} parent=31 // loop_header
            %s173 = sphi 0, %s177
            %p174 = scmp.ge.s32.totalorder %s173, 1
            %s178 = sphi %s0, %s0
            %s179 = sphi [#allocation2], [#allocation2]
          $region35: #{network_forward.3} parent=31 // loop_header_branch
            %176 = sbr.rel (%p174) target = $region39
          $region36: #{network_forward.3} parent=31 // loop_body
            %v180 = vld [vmem:[%s178] sm:$0xff]
            %181 = vst [vmem:[%s179] sm:$0xff] %v180
            %v182 = vld [vmem:[%s178 + $0x8] sm:$0xff]
            %183 = vst [vmem:[%s179 + $0x8] sm:$0xff] %v182
            %v184 = vld [vmem:[%s178 + $0x10] sm:$0xff]
            %185 = vst [vmem:[%s179 + $0x10] sm:$0xff] %v184
            %v186 = vld [vmem:[%s178 + $0x18] sm:$0xff]
            %187 = vst [vmem:[%s179 + $0x18] sm:$0xff] %v186
            %v188 = vld [vmem:[%s178 + $0x20] sm:$0xff]
            %189 = vst [vmem:[%s179 + $0x20] sm:$0xff] %v188
            %v190 = vld [vmem:[%s178 + $0x28] sm:$0xff]
            %191 = vst [vmem:[%s179 + $0x28] sm:$0xff] %v190
            %v192 = vld [vmem:[%s178 + $0x30] sm:$0xff]
            %193 = vst [vmem:[%s179 + $0x30] sm:$0xff] %v192
            %v194 = vld [vmem:[%s178 + $0x38] sm:$0xff]
            %195 = vst [vmem:[%s179 + $0x38] sm:$0xff] %v194
            %v196 = vld [vmem:[%s178 + $0x40] sm:$0xff]
            %197 = vst [vmem:[%s179 + $0x40] sm:$0xff] %v196
            %v198 = vld [vmem:[%s178 + $0x48] sm:$0xff]
            %199 = vst [vmem:[%s179 + $0x48] sm:$0xff] %v198
            %v200 = vld [vmem:[%s178 + $0x50] sm:$0xff]
            %201 = vst [vmem:[%s179 + $0x50] sm:$0xff] %v200
            %v202 = vld [vmem:[%s178 + $0x58] sm:$0xff]
            %203 = vst [vmem:[%s179 + $0x58] sm:$0xff] %v202
            %v204 = vld [vmem:[%s178 + $0x60] sm:$0xff]
            %205 = vst [vmem:[%s179 + $0x60] sm:$0xff] %v204
            %v206 = vld [vmem:[%s178 + $0x68] sm:$0xff]
            %207 = vst [vmem:[%s179 + $0x68] sm:$0xff] %v206
            %v208 = vld [vmem:[%s178 + $0x70] sm:$0xff]
            %209 = vst [vmem:[%s179 + $0x70] sm:$0xff] %v208
            %v210 = vld [vmem:[%s178 + $0x78] sm:$0xff]
            %211 = vst [vmem:[%s179 + $0x78] sm:$0xff] %v210
          $region37: #{network_forward.3} parent=31 // loop_footer
            %s177 = sadd.s32 1, %s173
          $region38: #{network_forward.3} parent=31 // loop_footer_branch
            %172 = sbr.rel target = $region34
          $region39: #{network_forward.3} parent=31 // loop_exit
            _
        $region32: #{network_forward.3} parent=27 // pred_fallthru
          _
        // Predicated region
        $region40: #{network_forward.3} parent=27 // pred_check
          _
        $region41: #{network_forward.3} parent=27 // pred_check_branch
          %213 = sbr.rel target = $region43
        $region42: #{network_forward.3} parent=27 // pred_region
          _
        $region43: #{network_forward.3} parent=27 // pred_fallthru
          _
        // Predicated region
        $region44: #{network_forward.3} parent=27 // pred_check
          _
        $region45: #{network_forward.3} parent=27 // pred_check_branch
          %216 = sbr.rel (0) target = $region47
        $region46: #{network_forward.3} parent=27 // pred_region
          %217 = vsyncadd [#allocation4], 2048
        $region47: #{network_forward.3} parent=27 // pred_fallthru
          _
        %s218 = smul.u32 128, 1
        %s219 = sshll.u32 %s218, 4
        %220 = dma.done [#allocation4], %s219
      $region28: #{network_forward.3} parent=23 // pred_fallthru
        _
      // Predicated region
      $region48: #{network_forward.3} parent=23 // pred_check
        %p221 = pneg %p165
      $region49: #{network_forward.3} parent=23 // pred_check_branch
        %223 = sbr.rel (%p221) target = $region51
      $region50: #{network_forward.3} parent=23 // pred_region
        %224 = vst [vmem:[#allocation3] sm:$0xff] 0.0
        %225 = vst [vmem:[#allocation3 + $0x8] sm:$0xff] 0.0
        %226 = vst [vmem:[#allocation3 + $0x10] sm:$0xff] 0.0
        %227 = vst [vmem:[#allocation3 + $0x18] sm:$0xff] 0.0
        %228 = vst [vmem:[#allocation3 + $0x20] sm:$0xff] 0.0
        %229 = vst [vmem:[#allocation3 + $0x28] sm:$0xff] 0.0
        %230 = vst [vmem:[#allocation3 + $0x30] sm:$0xff] 0.0
        %231 = vst [vmem:[#allocation3 + $0x38] sm:$0xff] 0.0
        %232 = vst [vmem:[#allocation3 + $0x40] sm:$0xff] 0.0
        %233 = vst [vmem:[#allocation3 + $0x48] sm:$0xff] 0.0
        %234 = vst [vmem:[#allocation3 + $0x50] sm:$0xff] 0.0
        %235 = vst [vmem:[#allocation3 + $0x58] sm:$0xff] 0.0
        %236 = vst [vmem:[#allocation3 + $0x60] sm:$0xff] 0.0
        %237 = vst [vmem:[#allocation3 + $0x68] sm:$0xff] 0.0
        %238 = vst [vmem:[#allocation3 + $0x70] sm:$0xff] 0.0
        %239 = vst [vmem:[#allocation3 + $0x78] sm:$0xff] 0.0
      $region51: #{network_forward.3} parent=23 // pred_fallthru
        _
      %p240 = scmp.lt.s32.totalorder %s18, 0
      %s241 = ssub.s32 0, %s18
      %s242 = scalar_select %p240, %s241, %s18
      %s243 = sand.u32 %s242, 1
      %s244 = ssub.s32 0, %s243
      %s245 = scalar_select %p240, %s244, %s243
      %p246 = scmp.ne.s32.totalorder %s245, 0
      %p247 = scmp.lt.s32.totalorder %s245, 0
      %p248 = pnand %p247, %p246
      %p249 = pneg %p248
      %s250 = sadd.s32 %s245, 2
      %s251 = scalar_select %p249, %s250, %s245
      %s252 = smul.u32 %s20, 128
      %s253 = smul.u32 %s251, 128
      %s254 = sadd.s32 %s252, %s253
      %s255 = scalar_lea.vmem [#allocation2], %s254
      %v256 = vld [vmem:[%s255] sm:$0xff]
      %v257 = vld [vmem:[%s255 + $0x8] sm:$0xff]
      %v258 = vld [vmem:[%s255 + $0x10] sm:$0xff]
      %v259 = vld [vmem:[%s255 + $0x18] sm:$0xff]
      %v260 = vld [vmem:[%s255 + $0x20] sm:$0xff]
      %v261 = vld [vmem:[%s255 + $0x28] sm:$0xff]
      %v262 = vld [vmem:[%s255 + $0x30] sm:$0xff]
      %v263 = vld [vmem:[%s255 + $0x38] sm:$0xff]
      %v264 = vld [vmem:[%s255 + $0x40] sm:$0xff]
      %v265 = vld [vmem:[%s255 + $0x48] sm:$0xff]
      %v266 = vld [vmem:[%s255 + $0x50] sm:$0xff]
      %v267 = vld [vmem:[%s255 + $0x58] sm:$0xff]
      %v268 = vld [vmem:[%s255 + $0x60] sm:$0xff]
      %v269 = vld [vmem:[%s255 + $0x68] sm:$0xff]
      %v270 = vld [vmem:[%s255 + $0x70] sm:$0xff]
      %v271 = vld [vmem:[%s255 + $0x78] sm:$0xff]
      %v272 = vld [vmem:[#allocation3] sm:$0xff]
      %v273 = vld [vmem:[#allocation3 + $0x8] sm:$0xff]
      %v274 = vld [vmem:[#allocation3 + $0x10] sm:$0xff]
      %v275 = vld [vmem:[#allocation3 + $0x18] sm:$0xff]
      %v276 = vld [vmem:[#allocation3 + $0x20] sm:$0xff]
      %v277 = vld [vmem:[#allocation3 + $0x28] sm:$0xff]
      %v278 = vld [vmem:[#allocation3 + $0x30] sm:$0xff]
      %v279 = vld [vmem:[#allocation3 + $0x38] sm:$0xff]
      %v280 = vld [vmem:[#allocation3 + $0x40] sm:$0xff]
      %v281 = vld [vmem:[#allocation3 + $0x48] sm:$0xff]
      %v282 = vld [vmem:[#allocation3 + $0x50] sm:$0xff]
      %v283 = vld [vmem:[#allocation3 + $0x58] sm:$0xff]
      %v284 = vld [vmem:[#allocation3 + $0x60] sm:$0xff]
      %v285 = vld [vmem:[#allocation3 + $0x68] sm:$0xff]
      %v286 = vld [vmem:[#allocation3 + $0x70] sm:$0xff]
      %v287 = vld [vmem:[#allocation3 + $0x78] sm:$0xff]
      %v288 = vld [vmem:[%s149] sm:$0xff]
      %v289 = vld [vmem:[%s149 + $0x8] sm:$0xff]
      %v290 = vld [vmem:[%s149 + $0x10] sm:$0xff]
      %v291 = vld [vmem:[%s149 + $0x18] sm:$0xff]
      %v292 = vld [vmem:[%s149 + $0x20] sm:$0xff]
      %v293 = vld [vmem:[%s149 + $0x28] sm:$0xff]
      %v294 = vld [vmem:[%s149 + $0x30] sm:$0xff]
      %v295 = vld [vmem:[%s149 + $0x38] sm:$0xff]
      %v296 = vld [vmem:[%s149 + $0x40] sm:$0xff]
      %v297 = vld [vmem:[%s149 + $0x48] sm:$0xff]
      %v298 = vld [vmem:[%s149 + $0x50] sm:$0xff]
      %v299 = vld [vmem:[%s149 + $0x58] sm:$0xff]
      %v300 = vld [vmem:[%s149 + $0x60] sm:$0xff]
      %v301 = vld [vmem:[%s149 + $0x68] sm:$0xff]
      %v302 = vld [vmem:[%s149 + $0x70] sm:$0xff]
      %v303 = vld [vmem:[%s149 + $0x78] sm:$0xff]
      %304 = vmatpush.msra.mxu0 %v271
      %305 = vmatpush.msra.mxu0 %v270
      %306 = vmatpush.msra.mxu0 %v269
      %307 = vmatpush.msra.mxu0 %v268
      %308 = vmatpush.msra.mxu0 %v267
      %309 = vmatpush.msra.mxu0 %v266
      %310 = vmatpush.msra.mxu0 %v265
      %311 = vmatpush.msra.mxu0 %v264
      %312 = vmatpush.msra.mxu0 %v263
      %313 = vmatpush.msra.mxu0 %v262
      %314 = vmatpush.msra.mxu0 %v261
      %315 = vmatpush.msra.mxu0 %v260
      %316 = vmatpush.msra.mxu0 %v259
      %317 = vmatpush.msra.mxu0 %v258
      %318 = vmatpush.msra.mxu0 %v257
      %319 = vmatpush.msra.mxu0 %v256
      %320 = vmatmul.f32.gmra.mxu0 %v288
      %v321 = vpop.f32.mrf.mxu0
      %v322 = vadd.f32 0.0, %v321
      %323 = vmatmul.f32.gmra.mxu0 %v289
      %v324 = vpop.f32.mrf.mxu0
      %v325 = vadd.f32 0.0, %v324
      %326 = vmatmul.f32.gmra.mxu0 %v290
      %v327 = vpop.f32.mrf.mxu0
      %v328 = vadd.f32 0.0, %v327
      %329 = vmatmul.f32.gmra.mxu0 %v291
      %v330 = vpop.f32.mrf.mxu0
      %v331 = vadd.f32 0.0, %v330
      %332 = vmatmul.f32.gmra.mxu0 %v292
      %v333 = vpop.f32.mrf.mxu0
      %v334 = vadd.f32 0.0, %v333
      %335 = vmatmul.f32.gmra.mxu0 %v293
      %v336 = vpop.f32.mrf.mxu0
      %v337 = vadd.f32 0.0, %v336
      %338 = vmatmul.f32.gmra.mxu0 %v294
      %v339 = vpop.f32.mrf.mxu0
      %v340 = vadd.f32 0.0, %v339
      %341 = vmatmul.f32.gmra.mxu0 %v295
      %v342 = vpop.f32.mrf.mxu0
      %v343 = vadd.f32 0.0, %v342
      %344 = vmatmul.f32.gmra.mxu0 %v296
      %v345 = vpop.f32.mrf.mxu0
      %v346 = vadd.f32 0.0, %v345
      %347 = vmatmul.f32.gmra.mxu0 %v297
      %v348 = vpop.f32.mrf.mxu0
      %v349 = vadd.f32 0.0, %v348
      %350 = vmatmul.f32.gmra.mxu0 %v298
      %v351 = vpop.f32.mrf.mxu0
      %v352 = vadd.f32 0.0, %v351
      %353 = vmatmul.f32.gmra.mxu0 %v299
      %v354 = vpop.f32.mrf.mxu0
      %v355 = vadd.f32 0.0, %v354
      %356 = vmatmul.f32.gmra.mxu0 %v300
      %v357 = vpop.f32.mrf.mxu0
      %v358 = vadd.f32 0.0, %v357
      %359 = vmatmul.f32.gmra.mxu0 %v301
      %v360 = vpop.f32.mrf.mxu0
      %v361 = vadd.f32 0.0, %v360
      %362 = vmatmul.f32.gmra.mxu0 %v302
      %v363 = vpop.f32.mrf.mxu0
      %v364 = vadd.f32 0.0, %v363
      %365 = vmatmul.f32.gmra.mxu0 %v303
      %v366 = vpop.f32.mrf.mxu0
      %v367 = vadd.f32 0.0, %v366
      %368 = vdwg.mxu0
      %v369 = vadd.f32 %v272, %v322
      %v370 = vadd.f32 %v273, %v325
      %v371 = vadd.f32 %v274, %v328
      %v372 = vadd.f32 %v275, %v331
      %v373 = vadd.f32 %v276, %v334
      %v374 = vadd.f32 %v277, %v337
      %v375 = vadd.f32 %v278, %v340
      %v376 = vadd.f32 %v279, %v343
      %v377 = vadd.f32 %v280, %v346
      %v378 = vadd.f32 %v281, %v349
      %v379 = vadd.f32 %v282, %v352
      %v380 = vadd.f32 %v283, %v355
      %v381 = vadd.f32 %v284, %v358
      %v382 = vadd.f32 %v285, %v361
      %v383 = vadd.f32 %v286, %v364
      %v384 = vadd.f32 %v287, %v367
      %385 = vst [vmem:[#allocation3] sm:$0xff] %v369
      %386 = vst [vmem:[#allocation3 + $0x8] sm:$0xff] %v370
      %387 = vst [vmem:[#allocation3 + $0x10] sm:$0xff] %v371
      %388 = vst [vmem:[#allocation3 + $0x18] sm:$0xff] %v372
      %389 = vst [vmem:[#allocation3 + $0x20] sm:$0xff] %v373
      %390 = vst [vmem:[#allocation3 + $0x28] sm:$0xff] %v374
      %391 = vst [vmem:[#allocation3 + $0x30] sm:$0xff] %v375
      %392 = vst [vmem:[#allocation3 + $0x38] sm:$0xff] %v376
      %393 = vst [vmem:[#allocation3 + $0x40] sm:$0xff] %v377
      %394 = vst [vmem:[#allocation3 + $0x48] sm:$0xff] %v378
      %395 = vst [vmem:[#allocation3 + $0x50] sm:$0xff] %v379
      %396 = vst [vmem:[#allocation3 + $0x58] sm:$0xff] %v380
      %397 = vst [vmem:[#allocation3 + $0x60] sm:$0xff] %v381
      %398 = vst [vmem:[#allocation3 + $0x68] sm:$0xff] %v382
      %399 = vst [vmem:[#allocation3 + $0x70] sm:$0xff] %v383
      %400 = vst [vmem:[#allocation3 + $0x78] sm:$0xff] %v384
      // Predicated region
      $region52: #{network_forward.3} parent=23 // pred_check
        %p401 = pneg %p165
      $region53: #{network_forward.3} parent=23 // pred_check_branch
        %403 = sbr.rel (%p401) target = $region55
      $region54: #{network_forward.3} parent=23 // pred_region
        %v404 = vld [vmem:[#allocation3] sm:$0xff]
        %v405 = vld [vmem:[#allocation3 + $0x8] sm:$0xff]
        %v406 = vld [vmem:[#allocation3 + $0x10] sm:$0xff]
        %v407 = vld [vmem:[#allocation3 + $0x18] sm:$0xff]
        %v408 = vld [vmem:[#allocation3 + $0x20] sm:$0xff]
        %v409 = vld [vmem:[#allocation3 + $0x28] sm:$0xff]
        %v410 = vld [vmem:[#allocation3 + $0x30] sm:$0xff]
        %v411 = vld [vmem:[#allocation3 + $0x38] sm:$0xff]
        %v412 = vld [vmem:[#allocation3 + $0x40] sm:$0xff]
        %v413 = vld [vmem:[#allocation3 + $0x48] sm:$0xff]
        %v414 = vld [vmem:[#allocation3 + $0x50] sm:$0xff]
        %v415 = vld [vmem:[#allocation3 + $0x58] sm:$0xff]
        %v416 = vld [vmem:[#allocation3 + $0x60] sm:$0xff]
        %v417 = vld [vmem:[#allocation3 + $0x68] sm:$0xff]
        %v418 = vld [vmem:[#allocation3 + $0x70] sm:$0xff]
        %v419 = vld [vmem:[#allocation3 + $0x78] sm:$0xff]
        %s420 = smul.u32 %s19, 128
        %s421 = ssub.s32 1, %s251
        %s422 = smul.u32 %s421, 128
        %s423 = sadd.s32 %s420, %s422
        %s424 = scalar_lea.vmem [#allocation2], %s423
        %425 = vst [vmem:[%s424] sm:$0xff] %v404
        %426 = vst [vmem:[%s424 + $0x8] sm:$0xff] %v405
        %427 = vst [vmem:[%s424 + $0x10] sm:$0xff] %v406
        %428 = vst [vmem:[%s424 + $0x18] sm:$0xff] %v407
        %429 = vst [vmem:[%s424 + $0x20] sm:$0xff] %v408
        %430 = vst [vmem:[%s424 + $0x28] sm:$0xff] %v409
        %431 = vst [vmem:[%s424 + $0x30] sm:$0xff] %v410
        %432 = vst [vmem:[%s424 + $0x38] sm:$0xff] %v411
        %433 = vst [vmem:[%s424 + $0x40] sm:$0xff] %v412
        %434 = vst [vmem:[%s424 + $0x48] sm:$0xff] %v413
        %435 = vst [vmem:[%s424 + $0x50] sm:$0xff] %v414
        %436 = vst [vmem:[%s424 + $0x58] sm:$0xff] %v415
        %437 = vst [vmem:[%s424 + $0x60] sm:$0xff] %v416
        %438 = vst [vmem:[%s424 + $0x68] sm:$0xff] %v417
        %439 = vst [vmem:[%s424 + $0x70] sm:$0xff] %v418
        %440 = vst [vmem:[%s424 + $0x78] sm:$0xff] %v419
        %p441 = scmp.eq.s32.totalorder %s18, 1
        // Predicated region
        $region56: #{network_forward.3} parent=54 // pred_check
          %p442 = pneg %p441
        $region57: #{network_forward.3} parent=54 // pred_check_branch
          %444 = sbr.rel (%p442) target = $region59
        $region58: #{network_forward.3} parent=54 // pred_region
          %445 = vst [vmem:[%s157] sm:$0xff] %v404
          %446 = vst [vmem:[%s157 + $0x8] sm:$0xff] %v405
          %447 = vst [vmem:[%s157 + $0x10] sm:$0xff] %v406
          %448 = vst [vmem:[%s157 + $0x18] sm:$0xff] %v407
          %449 = vst [vmem:[%s157 + $0x20] sm:$0xff] %v408
          %450 = vst [vmem:[%s157 + $0x28] sm:$0xff] %v409
          %451 = vst [vmem:[%s157 + $0x30] sm:$0xff] %v410
          %452 = vst [vmem:[%s157 + $0x38] sm:$0xff] %v411
          %453 = vst [vmem:[%s157 + $0x40] sm:$0xff] %v412
          %454 = vst [vmem:[%s157 + $0x48] sm:$0xff] %v413
          %455 = vst [vmem:[%s157 + $0x50] sm:$0xff] %v414
          %456 = vst [vmem:[%s157 + $0x58] sm:$0xff] %v415
          %457 = vst [vmem:[%s157 + $0x60] sm:$0xff] %v416
          %458 = vst [vmem:[%s157 + $0x68] sm:$0xff] %v417
          %459 = vst [vmem:[%s157 + $0x70] sm:$0xff] %v418
          %460 = vst [vmem:[%s157 + $0x78] sm:$0xff] %v419
        $region59: #{network_forward.3} parent=54 // pred_fallthru
          _
      $region55: #{network_forward.3} parent=23 // pred_fallthru
        _
      %p461 = scmp.eq.s32.totalorder %s18, 1
      %s462 = scalar_select %p461, %s19, 0
      %s463 = smul.u32 16, %s462
      %p464 = scmp.lt.s32.totalorder %s463, 15
      %s465 = scalar_select %p464, %s463, 15
      %s466 = smul.addr %s465, 8
      %s467 = scalar_lea.vmem %s2, %s466
      // Predicated region
      $region60: #{network_forward.3} parent=23 // pred_check
        %p468 = pneg %p82
      $region61: #{network_forward.3} parent=23 // pred_check_branch
        %470 = sbr.rel (%p468) target = $region63
      $region62: #{network_forward.3} parent=23 // pred_region
        %p471 = scmp.eq.s32.totalorder %s18, 1
        %s472 = scalar_select %p471, %s19, 0
        %s473 = smul.u32 16, %s472
      $region63: #{network_forward.3} parent=23 // pred_fallthru
        _
    $region24: #{network_forward.3} parent=5 // pred_fallthru
      _
    %p474 = scmp.le.s32.totalorder 2, %s8
    // Predicated region
    $region64: #{network_forward.3} parent=5 // pred_check
      %p475 = pneg %p474
    $region65: #{network_forward.3} parent=5 // pred_check_branch
      %477 = sbr.rel (%p475) target = $region67
    $region66: #{network_forward.3} parent=5 // pred_region
      %s478 = ssub.s32 %s8, 2
      // Predicated region
      $region68: #{network_forward.3} parent=66 // pred_check
        %p479 = pneg %p88
      $region69: #{network_forward.3} parent=66 // pred_check_branch
        %481 = sbr.rel (%p479) target = $region71
      $region70: #{network_forward.3} parent=66 // pred_region
        %p482 = scmp.eq.s32.totalorder %s21, 1
        %s483 = scalar_select %p482, %s22, 0
        %s484 = smul.u32 16, %s483
        %p485 = scmp.lt.s32.totalorder %s484, 15
        %s486 = scalar_select %p485, %s484, 15
        %s487 = smul.addr %s486, 8
        %s488 = scalar_lea.vmem %s2, %s487
      $region71: #{network_forward.3} parent=66 // pred_fallthru
        _
    $region67: #{network_forward.3} parent=5 // pred_fallthru
      _
  $region6: #{network_forward.3} parent=0 // loop_footer
    %s12 = sadd.s32 1, %s8
  $region7: #{network_forward.3} parent=0 // loop_footer_branch
    %7 = sbr.rel target = $region3
  $region8: #{network_forward.3} parent=0 // loop_exit
    _
  %489 = vsyncmov [#allocation4]
  %s490 = vpop.sfrf %489
  %p491 = scmp.eq.s32.totalorder %s490, 0
  %p492 = pneg %p491
  %494 = shalt.err (%p492)

// kernel: network_forward.2
$region0: #{network_forward.2}
  #allocation0 [shape = 'u32[]', space=smem, size = 0x4, offset = 0x4, fixed_abs, tag = 'smem constant byte address 0x4 - core index']
  #allocation1 [shape = 'u32[72,128]{1,0:T(1,128)}', space=vmem, size = 0x9000, scoped, tag = 'internal scratch']
  #allocation2 [shape = 'f32[128,128]{1,0:T(8,128)}', space=vmem, size = 0x10000, scoped, tag = 'scratch operand']
  %s0 = inlined_call_operand.vmem [shape: f32[128,128], index: 0, kind: input, shape index: {}]
  %s1 = inlined_call_operand.vmem [shape: f32[128,128], index: 1, kind: input, shape index: {}]
  %s2 = inlined_call_operand.vmem [shape: f32[1,128], index: 2, kind: input, shape index: {}]
  %s3 = inlined_call_operand.vmem [shape: f32[128,128], index: 3, kind: output, shape index: {}]
  %s4 = sld [smem:[#allocation0]]
  $region30: #{network_forward.2} parent=0
    _
  %s6 = ssub.s32 1, %s4
  %s7 = scalar_select 0, %s6, %s4
  // Predicated region
  $region2: #{network_forward.2} parent=0 // pred_check
    _
  $region3: #{network_forward.2} parent=0 // pred_check_branch
    %9 = sbr.rel (0) target = $region5
  $region4: #{network_forward.2} parent=0 // pred_region
    _
  $region5: #{network_forward.2} parent=0 // pred_fallthru
    _
  // Predicated region
  $region6: #{network_forward.2} parent=0 // pred_check
    _
  $region7: #{network_forward.2} parent=0 // pred_check_branch
    %11 = sbr.rel (0) target = $region9
  $region8: #{network_forward.2} parent=0 // pred_region
    _
  $region9: #{network_forward.2} parent=0 // pred_fallthru
    _
  // Predicated region
  $region10: #{network_forward.2} parent=0 // pred_check
    _
  $region11: #{network_forward.2} parent=0 // pred_check_branch
    %13 = sbr.rel (0) target = $region13
  $region12: #{network_forward.2} parent=0 // pred_region
    _
  $region13: #{network_forward.2} parent=0 // pred_fallthru
    _
  %p14 = scmp.eq.s32.totalorder 0, 0
  // Predicated region
  $region14: #{network_forward.2} parent=0 // pred_check
    %p15 = pneg %p14
  $region15: #{network_forward.2} parent=0 // pred_check_branch
    %17 = sbr.rel (%p15) target = $region17
  $region16: #{network_forward.2} parent=0 // pred_region
    %18 = vst [vmem:[#allocation2] sm:$0xff] 0.0
    %19 = vst [vmem:[#allocation2 + $0x8] sm:$0xff] 0.0
    %20 = vst [vmem:[#allocation2 + $0x10] sm:$0xff] 0.0
    %21 = vst [vmem:[#allocation2 + $0x18] sm:$0xff] 0.0
    %22 = vst [vmem:[#allocation2 + $0x20] sm:$0xff] 0.0
    %23 = vst [vmem:[#allocation2 + $0x28] sm:$0xff] 0.0
    %24 = vst [vmem:[#allocation2 + $0x30] sm:$0xff] 0.0
    %25 = vst [vmem:[#allocation2 + $0x38] sm:$0xff] 0.0
    %26 = vst [vmem:[#allocation2 + $0x40] sm:$0xff] 0.0
    %27 = vst [vmem:[#allocation2 + $0x48] sm:$0xff] 0.0
    %28 = vst [vmem:[#allocation2 + $0x50] sm:$0xff] 0.0
    %29 = vst [vmem:[#allocation2 + $0x58] sm:$0xff] 0.0
    %30 = vst [vmem:[#allocation2 + $0x60] sm:$0xff] 0.0
    %31 = vst [vmem:[#allocation2 + $0x68] sm:$0xff] 0.0
    %32 = vst [vmem:[#allocation2 + $0x70] sm:$0xff] 0.0
    %33 = vst [vmem:[#allocation2 + $0x78] sm:$0xff] 0.0
  $region17: #{network_forward.2} parent=0 // pred_fallthru
    _
  %v34 = vld [vmem:[#allocation2] sm:$0xff]
  %v35 = vld [vmem:[#allocation2 + $0x8] sm:$0xff]
  %v36 = vld [vmem:[#allocation2 + $0x10] sm:$0xff]
  %v37 = vld [vmem:[#allocation2 + $0x18] sm:$0xff]
  %v38 = vld [vmem:[#allocation2 + $0x20] sm:$0xff]
  %v39 = vld [vmem:[#allocation2 + $0x28] sm:$0xff]
  %v40 = vld [vmem:[#allocation2 + $0x30] sm:$0xff]
  %v41 = vld [vmem:[#allocation2 + $0x38] sm:$0xff]
  %v42 = vld [vmem:[#allocation2 + $0x40] sm:$0xff]
  %v43 = vld [vmem:[#allocation2 + $0x48] sm:$0xff]
  %v44 = vld [vmem:[#allocation2 + $0x50] sm:$0xff]
  %v45 = vld [vmem:[#allocation2 + $0x58] sm:$0xff]
  %v46 = vld [vmem:[#allocation2 + $0x60] sm:$0xff]
  %v47 = vld [vmem:[#allocation2 + $0x68] sm:$0xff]
  %v48 = vld [vmem:[#allocation2 + $0x70] sm:$0xff]
  %v49 = vld [vmem:[#allocation2 + $0x78] sm:$0xff]
  %v50 = vld [vmem:[%s0] sm:$0xff]
  %v51 = vld [vmem:[%s0 + $0x8] sm:$0xff]
  %v52 = vld [vmem:[%s0 + $0x10] sm:$0xff]
  %v53 = vld [vmem:[%s0 + $0x18] sm:$0xff]
  %v54 = vld [vmem:[%s0 + $0x20] sm:$0xff]
  %v55 = vld [vmem:[%s0 + $0x28] sm:$0xff]
  %v56 = vld [vmem:[%s0 + $0x30] sm:$0xff]
  %v57 = vld [vmem:[%s0 + $0x38] sm:$0xff]
  %v58 = vld [vmem:[%s0 + $0x40] sm:$0xff]
  %v59 = vld [vmem:[%s0 + $0x48] sm:$0xff]
  %v60 = vld [vmem:[%s0 + $0x50] sm:$0xff]
  %v61 = vld [vmem:[%s0 + $0x58] sm:$0xff]
  %v62 = vld [vmem:[%s0 + $0x60] sm:$0xff]
  %v63 = vld [vmem:[%s0 + $0x68] sm:$0xff]
  %v64 = vld [vmem:[%s0 + $0x70] sm:$0xff]
  %v65 = vld [vmem:[%s0 + $0x78] sm:$0xff]
  %v66 = vld [vmem:[%s1] sm:$0xff]
  %v67 = vld [vmem:[%s1 + $0x8] sm:$0xff]
  %v68 = vld [vmem:[%s1 + $0x10] sm:$0xff]
  %v69 = vld [vmem:[%s1 + $0x18] sm:$0xff]
  %v70 = vld [vmem:[%s1 + $0x20] sm:$0xff]
  %v71 = vld [vmem:[%s1 + $0x28] sm:$0xff]
  %v72 = vld [vmem:[%s1 + $0x30] sm:$0xff]
  %v73 = vld [vmem:[%s1 + $0x38] sm:$0xff]
  %v74 = vld [vmem:[%s1 + $0x40] sm:$0xff]
  %v75 = vld [vmem:[%s1 + $0x48] sm:$0xff]
  %v76 = vld [vmem:[%s1 + $0x50] sm:$0xff]
  %v77 = vld [vmem:[%s1 + $0x58] sm:$0xff]
  %v78 = vld [vmem:[%s1 + $0x60] sm:$0xff]
  %v79 = vld [vmem:[%s1 + $0x68] sm:$0xff]
  %v80 = vld [vmem:[%s1 + $0x70] sm:$0xff]
  %v81 = vld [vmem:[%s1 + $0x78] sm:$0xff]
  %82 = vmatpush.msra.mxu0 %v81
  %83 = vmatpush.msra.mxu0 %v80
  %84 = vmatpush.msra.mxu0 %v79
  %85 = vmatpush.msra.mxu0 %v78
  %86 = vmatpush.msra.mxu0 %v77
  %87 = vmatpush.msra.mxu0 %v76
  %88 = vmatpush.msra.mxu0 %v75
  %89 = vmatpush.msra.mxu0 %v74
  %90 = vmatpush.msra.mxu0 %v73
  %91 = vmatpush.msra.mxu0 %v72
  %92 = vmatpush.msra.mxu0 %v71
  %93 = vmatpush.msra.mxu0 %v70
  %94 = vmatpush.msra.mxu0 %v69
  %95 = vmatpush.msra.mxu0 %v68
  %96 = vmatpush.msra.mxu0 %v67
  %97 = vmatpush.msra.mxu0 %v66
  %98 = vmatmul.f32.gmra.mxu0 %v50
  %v99 = vpop.f32.mrf.mxu0
  %v100 = vadd.f32 0.0, %v99
  %101 = vmatmul.f32.gmra.mxu0 %v51
  %v102 = vpop.f32.mrf.mxu0
  %v103 = vadd.f32 0.0, %v102
  %104 = vmatmul.f32.gmra.mxu0 %v52
  %v105 = vpop.f32.mrf.mxu0
  %v106 = vadd.f32 0.0, %v105
  %107 = vmatmul.f32.gmra.mxu0 %v53
  %v108 = vpop.f32.mrf.mxu0
  %v109 = vadd.f32 0.0, %v108
  %110 = vmatmul.f32.gmra.mxu0 %v54
  %v111 = vpop.f32.mrf.mxu0
  %v112 = vadd.f32 0.0, %v111
  %113 = vmatmul.f32.gmra.mxu0 %v55
  %v114 = vpop.f32.mrf.mxu0
  %v115 = vadd.f32 0.0, %v114
  %116 = vmatmul.f32.gmra.mxu0 %v56
  %v117 = vpop.f32.mrf.mxu0
  %v118 = vadd.f32 0.0, %v117
  %119 = vmatmul.f32.gmra.mxu0 %v57
  %v120 = vpop.f32.mrf.mxu0
  %v121 = vadd.f32 0.0, %v120
  %122 = vmatmul.f32.gmra.mxu0 %v58
  %v123 = vpop.f32.mrf.mxu0
  %v124 = vadd.f32 0.0, %v123
  %125 = vmatmul.f32.gmra.mxu0 %v59
  %v126 = vpop.f32.mrf.mxu0
  %v127 = vadd.f32 0.0, %v126
  %128 = vmatmul.f32.gmra.mxu0 %v60
  %v129 = vpop.f32.mrf.mxu0
  %v130 = vadd.f32 0.0, %v129
  %131 = vmatmul.f32.gmra.mxu0 %v61
  %v132 = vpop.f32.mrf.mxu0
  %v133 = vadd.f32 0.0, %v132
  %134 = vmatmul.f32.gmra.mxu0 %v62
  %v135 = vpop.f32.mrf.mxu0
  %v136 = vadd.f32 0.0, %v135
  %137 = vmatmul.f32.gmra.mxu0 %v63
  %v138 = vpop.f32.mrf.mxu0
  %v139 = vadd.f32 0.0, %v138
  %140 = vmatmul.f32.gmra.mxu0 %v64
  %v141 = vpop.f32.mrf.mxu0
  %v142 = vadd.f32 0.0, %v141
  %143 = vmatmul.f32.gmra.mxu0 %v65
  %v144 = vpop.f32.mrf.mxu0
  %v145 = vadd.f32 0.0, %v144
  %146 = vdwg.mxu0
  %v147 = vadd.f32 %v34, %v100
  %v148 = vadd.f32 %v35, %v103
  %v149 = vadd.f32 %v36, %v106
  %v150 = vadd.f32 %v37, %v109
  %v151 = vadd.f32 %v38, %v112
  %v152 = vadd.f32 %v39, %v115
  %v153 = vadd.f32 %v40, %v118
  %v154 = vadd.f32 %v41, %v121
  %v155 = vadd.f32 %v42, %v124
  %v156 = vadd.f32 %v43, %v127
  %v157 = vadd.f32 %v44, %v130
  %v158 = vadd.f32 %v45, %v133
  %v159 = vadd.f32 %v46, %v136
  %v160 = vadd.f32 %v47, %v139
  %v161 = vadd.f32 %v48, %v142
  %v162 = vadd.f32 %v49, %v145
  %163 = vst [vmem:[#allocation2] sm:$0xff] %v147
  %164 = vst [vmem:[#allocation2 + $0x8] sm:$0xff] %v148
  %165 = vst [vmem:[#allocation2 + $0x10] sm:$0xff] %v149
  %166 = vst [vmem:[#allocation2 + $0x18] sm:$0xff] %v150
  %167 = vst [vmem:[#allocation2 + $0x20] sm:$0xff] %v151
  %168 = vst [vmem:[#allocation2 + $0x28] sm:$0xff] %v152
  %169 = vst [vmem:[#allocation2 + $0x30] sm:$0xff] %v153
  %170 = vst [vmem:[#allocation2 + $0x38] sm:$0xff] %v154
  %171 = vst [vmem:[#allocation2 + $0x40] sm:$0xff] %v155
  %172 = vst [vmem:[#allocation2 + $0x48] sm:$0xff] %v156
  %173 = vst [vmem:[#allocation2 + $0x50] sm:$0xff] %v157
  %174 = vst [vmem:[#allocation2 + $0x58] sm:$0xff] %v158
  %175 = vst [vmem:[#allocation2 + $0x60] sm:$0xff] %v159
  %176 = vst [vmem:[#allocation2 + $0x68] sm:$0xff] %v160
  %177 = vst [vmem:[#allocation2 + $0x70] sm:$0xff] %v161
  %178 = vst [vmem:[#allocation2 + $0x78] sm:$0xff] %v162
  // Predicated region
  $region18: #{network_forward.2} parent=0 // pred_check
    %p179 = pneg %p14
  $region19: #{network_forward.2} parent=0 // pred_check_branch
    %181 = sbr.rel (%p179) target = $region21
  $region20: #{network_forward.2} parent=0 // pred_region
    %v182 = vld [vmem:[#allocation2] sm:$0xff]
    %v183 = vld [vmem:[#allocation2 + $0x8] sm:$0xff]
    %v184 = vld [vmem:[#allocation2 + $0x10] sm:$0xff]
    %v185 = vld [vmem:[#allocation2 + $0x18] sm:$0xff]
    %v186 = vld [vmem:[#allocation2 + $0x20] sm:$0xff]
    %v187 = vld [vmem:[#allocation2 + $0x28] sm:$0xff]
    %v188 = vld [vmem:[#allocation2 + $0x30] sm:$0xff]
    %v189 = vld [vmem:[#allocation2 + $0x38] sm:$0xff]
    %v190 = vld [vmem:[#allocation2 + $0x40] sm:$0xff]
    %v191 = vld [vmem:[#allocation2 + $0x48] sm:$0xff]
    %v192 = vld [vmem:[#allocation2 + $0x50] sm:$0xff]
    %v193 = vld [vmem:[#allocation2 + $0x58] sm:$0xff]
    %v194 = vld [vmem:[#allocation2 + $0x60] sm:$0xff]
    %v195 = vld [vmem:[#allocation2 + $0x68] sm:$0xff]
    %v196 = vld [vmem:[#allocation2 + $0x70] sm:$0xff]
    %v197 = vld [vmem:[#allocation2 + $0x78] sm:$0xff]
    %v198 = vld [vmem:[%s2] sm:$0x1]
    %v200 = vperm.slane %v198, 0
    %v202 = vadd.f32 %v182, %v200
    %v203 = vadd.f32 %v183, %v200
    %v204 = vadd.f32 %v184, %v200
    %v205 = vadd.f32 %v185, %v200
    %v206 = vadd.f32 %v186, %v200
    %v207 = vadd.f32 %v187, %v200
    %v208 = vadd.f32 %v188, %v200
    %v209 = vadd.f32 %v189, %v200
    %v210 = vadd.f32 %v190, %v200
    %v211 = vadd.f32 %v191, %v200
    %v212 = vadd.f32 %v192, %v200
    %v213 = vadd.f32 %v193, %v200
    %v214 = vadd.f32 %v194, %v200
    %v215 = vadd.f32 %v195, %v200
    %v216 = vadd.f32 %v196, %v200
    %v217 = vadd.f32 %v197, %v200
    %218 = vst [vmem:[%s3] sm:$0xff] %v202
    %219 = vst [vmem:[%s3 + $0x8] sm:$0xff] %v203
    %220 = vst [vmem:[%s3 + $0x10] sm:$0xff] %v204
    %221 = vst [vmem:[%s3 + $0x18] sm:$0xff] %v205
    %222 = vst [vmem:[%s3 + $0x20] sm:$0xff] %v206
    %223 = vst [vmem:[%s3 + $0x28] sm:$0xff] %v207
    %224 = vst [vmem:[%s3 + $0x30] sm:$0xff] %v208
    %225 = vst [vmem:[%s3 + $0x38] sm:$0xff] %v209
    %226 = vst [vmem:[%s3 + $0x40] sm:$0xff] %v210
    %227 = vst [vmem:[%s3 + $0x48] sm:$0xff] %v211
    %228 = vst [vmem:[%s3 + $0x50] sm:$0xff] %v212
    %229 = vst [vmem:[%s3 + $0x58] sm:$0xff] %v213
    %230 = vst [vmem:[%s3 + $0x60] sm:$0xff] %v214
    %231 = vst [vmem:[%s3 + $0x68] sm:$0xff] %v215
    %232 = vst [vmem:[%s3 + $0x70] sm:$0xff] %v216
    %233 = vst [vmem:[%s3 + $0x78] sm:$0xff] %v217
  $region21: #{network_forward.2} parent=0 // pred_fallthru
    _
  // Predicated region
  $region22: #{network_forward.2} parent=0 // pred_check
    _
  $region23: #{network_forward.2} parent=0 // pred_check_branch
    %235 = sbr.rel (0) target = $region25
  $region24: #{network_forward.2} parent=0 // pred_region
    _
  $region25: #{network_forward.2} parent=0 // pred_fallthru
    _
  // Predicated region
  $region26: #{network_forward.2} parent=0 // pred_check
    _
  $region27: #{network_forward.2} parent=0 // pred_check_branch
    %237 = sbr.rel (0) target = $region29
  $region28: #{network_forward.2} parent=0 // pred_region
    _
  $region29: #{network_forward.2} parent=0 // pred_fallthru
    _

</llo_original>
